<compile_context>
chip_gen: v5e
topology: v5e:2x2
jax: 0.10.0
libtpu: 0.0.40
codegen_flags: <defaults>
</compile_context>

<pallas_src>
import jax
import jax.numpy as jnp
from jax import lax
from jax.experimental import pallas as pl
from jax.experimental.pallas import tpu as pltpu

# --- hyperparameters standing in for the argparse `args` ---
RALPHA = 0.2     # args.ralpha  (LeakyReLU negative slope)
SCALEF = 1.0     # args.scalef  (decoder output scale)
BN_EPS = 1e-5    # torch BatchNorm1d default eps

# model dims (args.first, args.second, args.third) and input size
DIM_FIRST = 32
DIM_SECOND = 16
DIM_THIRD = 8    # latent dim (zdim)
INPUT_SIZE = 32
BATCH = 16       # multiple of 16 so bf16 MXU operand vregs are fully packed

# (fan_in, fan_out, has_batchnorm) for every Linear in forward order:
#   encoder L1/L2/L3 (L3 emits [mu | log_var]), decoder L1/L2/L3 (L3 is Linear+Tanh).
LAYER_DIMS = (
    (INPUT_SIZE, DIM_FIRST, True),
    (DIM_FIRST, DIM_SECOND, True),
    (DIM_SECOND, 2 * DIM_THIRD, True),
    (DIM_THIRD, DIM_SECOND, True),
    (DIM_SECOND, DIM_FIRST, True),
    (DIM_FIRST, INPUT_SIZE, False),
)
NUM_LAYERS = len(LAYER_DIMS)
MAX_DIM = 32          # max fan-in/out; every activation is kept at this lane width
VPLANE = NUM_LAYERS   # index of the bias/gamma/beta plane inside the param slab

OUT_Z0 = 0
OUT_MS0 = DIM_THIRD                     # 8
OUT_XR0 = 3 * DIM_THIRD                 # 24
OUT_TOTAL = 3 * DIM_THIRD + INPUT_SIZE  # 56


def vae_kernel(xe_ref, p_ref, out_ref):
    """Whole VAE forward from two VMEM-resident operands.

    xe_ref  : (B, INPUT_SIZE + DIM_THIRD) f32   = [ x | eps ]
    p_ref   : (NUM_LAYERS + 1, MAX_DIM, MAX_DIM) bf16
              planes 0..5 = zero-padded (in,out) weights,
              plane 6 rows 3i / 3i+1 / 3i+2 = bias / gamma / beta of layer i (zero-padded)
    out_ref : (B, OUT_TOTAL) f32                = [ z | mu_std | x_r ]
    """
    # Load the bias/gamma/beta plane once; f32 copy keeps all row slices simple.
    vp = p_ref[VPLANE].astype(jnp.float32)          # (32, 32), stays in vregs

    def linear(h, idx):
        # Full padded (B,32)@(32,32); zero-padded weight rows/cols annihilate padded lanes.
        b = vp[3 * idx:3 * idx + 1, :]
        return jnp.dot(h.astype(jnp.bfloat16), p_ref[idx],
                       preferred_element_type=jnp.float32) + b

    def leaky(h):
        return jnp.where(h >= 0, h, RALPHA * h)

    def batchnorm(h, idx):
        # Training-mode batch stats (biased variance), fused affine.
        g = vp[3 * idx + 1:3 * idx + 2, :]
        bt = vp[3 * idx + 2:3 * idx + 3, :]
        mean = jnp.mean(h, axis=0, keepdims=True)
        var = jnp.mean((h - mean) ** 2, axis=0, keepdims=True)
        s = g * lax.rsqrt(var + BN_EPS)             # zero-padded gamma -> padded lanes stay 0
        t = bt - mean * s
        return h * s + t

    def block(h, idx):
        # TODO(synk): training-mode Dropout (mask + 1/(1-p) scaling) not implemented; identity.
        return batchnorm(leaky(linear(h, idx)), idx)

    # ---- Encoder (padded 32-lane activations throughout) ----
    h = xe_ref[:, :INPUT_SIZE]                       # (B, 32)
    h = block(h, 0)
    h = block(h, 1)
    h = block(h, 2)                                  # lanes 0:16 = [mu | log_var], 16:32 = 0

    # ---- Reparameterization: z = mu + exp(0.5 * log_var) * eps ----
    mu = h[:, :DIM_THIRD]
    log_var = h[:, DIM_THIRD:2 * DIM_THIRD]
    eps = xe_ref[:, INPUT_SIZE:]
    z = mu + jnp.exp(0.5 * log_var) * eps            # (B, 8)

    # ---- Decoder (re-pad z to the 32-lane layout with explicit zeros) ----
    d = jnp.concatenate(
        [z, jnp.zeros((z.shape[0], MAX_DIM - DIM_THIRD), jnp.float32)], axis=1)
    d = block(d, 3)
    d = block(d, 4)
    x_r = jnp.tanh(linear(d, 5)) * SCALEF            # (B, 32)

    # ---- Single full-block store of the packed output slab ----
    out_ref[...] = jnp.concatenate([z, h[:, :2 * DIM_THIRD], x_r], axis=1)


def init_params(key):
    """Per-layer (w, b, gamma, beta) matching the PyTorch module's shapes.

    Weights stored as (in_features, out_features) so the kernel computes h @ W + b.
    BN gamma/beta are randomized (instead of torch's 1/0 init) purely so the test
    exercises the affine path.
    """
    params = []
    keys = jax.random.split(key, NUM_LAYERS)
    for k, (fi, fo, has_bn) in zip(keys, LAYER_DIMS):
        kw, kb, kg, kt = jax.random.split(k, 4)
        w = jax.random.normal(kw, (fi, fo), jnp.float32) * 0.1
        b = jax.random.normal(kb, (1, fo), jnp.float32) * 0.01
        if has_bn:
            g = 1.0 + 0.1 * jax.random.normal(kg, (1, fo), jnp.float32)
            bt = 0.1 * jax.random.normal(kt, (1, fo), jnp.float32)
        else:
            g = bt = None
        params.append((w, b, g, bt))
    return params


def pack_params(layer_params):
    """Pack ALL per-layer params into one zero-padded bf16 slab (one DMA, no in-kernel casts)."""
    slab = jnp.zeros((NUM_LAYERS + 1, MAX_DIM, MAX_DIM), jnp.float32)
    for i, ((fi, fo, has_bn), (w, b, g, bt)) in enumerate(zip(LAYER_DIMS, layer_params)):
        slab = slab.at[i, :fi, :fo].set(w)
        slab = slab.at[VPLANE, 3 * i, :fo].set(b.reshape(-1))
        if has_bn:
            slab = slab.at[VPLANE, 3 * i + 1, :fo].set(g.reshape(-1))
            slab = slab.at[VPLANE, 3 * i + 2, :fo].set(bt.reshape(-1))
    return slab.astype(jnp.bfloat16)


@jax.jit
def vae_forward(x, eps, p_slab):
    b = x.shape[0]
    xe = jnp.concatenate([x, eps], axis=1)           # one (B, 40) input operand
    vmem = pl.BlockSpec(memory_space=pltpu.MemorySpace.VMEM)
    cost = pl.CostEstimate(
        flops=2 * b * MAX_DIM * MAX_DIM * NUM_LAYERS,
        transcendentals=b * (DIM_THIRD + INPUT_SIZE) + 5 * MAX_DIM,
        bytes_accessed=(xe.size * xe.dtype.itemsize
                        + p_slab.size * p_slab.dtype.itemsize
                        + b * OUT_TOTAL * 4),
    )
    slab = pl.pallas_call(
        vae_kernel,
        out_shape=jax.ShapeDtypeStruct((b, OUT_TOTAL), jnp.float32),
        in_specs=[vmem, vmem],
        out_specs=vmem,
        cost_estimate=cost,
    )(xe, p_slab)

    # Split the packed output slab; mu / log_var are slices of mu_std.
    z = slab[:, OUT_Z0:OUT_MS0]
    mu_std = slab[:, OUT_MS0:OUT_XR0]
    x_r = slab[:, OUT_XR0:]
    mu = mu_std[:, :DIM_THIRD]
    log_var = mu_std[:, DIM_THIRD:]
    return z, mu, log_var, mu_std, x_r


def vae_forward_ref(x, eps, layer_params):
    """Pure-JAX reference mirroring the kernel numerics (bf16 params, f32 accumulate/stats)."""

    def lin(h, w, b):
        return jnp.dot(h.astype(jnp.bfloat16), w.astype(jnp.bfloat16),
                       preferred_element_type=jnp.float32) + b.astype(jnp.bfloat16)

    def lrelu(h):
        return jnp.where(h >= 0, h, RALPHA * h)

    def bnorm(h, g, bt):
        m = jnp.mean(h, axis=0, keepdims=True)
        v = jnp.mean((h - m) ** 2, axis=0, keepdims=True)
        s = g.astype(jnp.bfloat16) * lax.rsqrt(v + BN_EPS)
        t = bt.astype(jnp.bfloat16) - m * s
        return h * s + t

    h = x
    for i in range(3):
        w, b, g, bt = layer_params[i]
        h = bnorm(lrelu(lin(h, w, b)), g, bt)
    mu_std = h
    mu, log_var = mu_std[:, :DIM_THIRD], mu_std[:, DIM_THIRD:]
    z = mu + jnp.exp(0.5 * log_var) * eps
    d = z
    for i in range(3, 5):
        w, b, g, bt = layer_params[i]
        d = bnorm(lrelu(lin(d, w, b)), g, bt)
    w, b, _, _ = layer_params[5]
    x_r = jnp.tanh(lin(d, w, b)) * SCALEF
    return z, mu, log_var, mu_std, x_r


if __name__ == "__main__":
    key = jax.random.PRNGKey(0)
    kx, keps, kp = jax.random.split(key, 3)

    x = jax.random.normal(kx, (BATCH, INPUT_SIZE), jnp.float32)
    eps = jax.random.normal(keps, (BATCH, DIM_THIRD), jnp.float32)
    params = init_params(kp)
    p_slab = pack_params(params)

    outs = jax.block_until_ready(vae_forward(x, eps, p_slab))
    refs = vae_forward_ref(x, eps, params)

    for o, r in zip(outs, refs):
        assert o.shape == r.shape and o.dtype == r.dtype
        assert jnp.allclose(o, r, atol=1e-2, rtol=1e-2), "Pallas output mismatch vs reference"

    print("KERNEL_OK")
</pallas_src>

<mosaic_0001>
module attributes {stable_mosaic.version = 11 : i64} {
  func.func @vae_kernel(%arg0: memref<16x40xf32, #tpu.memory_space<vmem>>, %arg1: memref<7x32x32xbf16, #tpu.memory_space<vmem>>, %arg2: memref<16x56xf32, #tpu.memory_space<vmem>>) attributes {dimension_semantics = [], scalar_prefetch = 0 : i64, scratch_operands = 0 : i64, tpu.core_type = #tpu.core_type<tc>} {
    %c6 = arith.constant 6 : index
    %c0 = arith.constant 0 : index
    %c0_0 = arith.constant 0 : index
    %0 = vector.load %arg1[%c6, %c0, %c0_0] : memref<7x32x32xbf16, #tpu.memory_space<vmem>>, vector<1x32x32xbf16>
    %1 = vector.shape_cast %0 : vector<1x32x32xbf16> to vector<32x32xbf16>
    %2 = arith.extf %1 : vector<32x32xbf16> to vector<32x32xf32>
    %c0_1 = arith.constant 0 : index
    %c0_2 = arith.constant 0 : index
    %3 = vector.load %arg0[%c0_1, %c0_2] : memref<16x40xf32, #tpu.memory_space<vmem>>, vector<16x32xf32>
    %4 = vector.extract_strided_slice %2 {offsets = [0, 0], sizes = [1, 32], strides = [1, 1]} : vector<32x32xf32> to vector<1x32xf32>
    %5 = arith.truncf %3 : vector<16x32xf32> to vector<16x32xbf16>
    %c0_3 = arith.constant 0 : index
    %c0_4 = arith.constant 0 : index
    %c0_5 = arith.constant 0 : index
    %6 = vector.load %arg1[%c0_3, %c0_4, %c0_5] : memref<7x32x32xbf16, #tpu.memory_space<vmem>>, vector<1x32x32xbf16>
    %7 = vector.shape_cast %6 : vector<1x32x32xbf16> to vector<32x32xbf16>
    %cst = arith.constant dense<0.000000e+00> : vector<16x32xf32>
    %8 = tpu.matmul %5, %7, %cst {dimension_numbers = #tpu.dot_dimension_numbers<[1], [0], [0], [1], [0, 0, 1, 1], [], []>} : vector<16x32xbf16>, vector<32x32xbf16>, vector<16x32xf32> -> vector<16x32xf32>
    %9 = vector.broadcast %4 : vector<1x32xf32> to vector<16x32xf32>
    %10 = arith.addf %8, %9 : vector<16x32xf32>
    %cst_6 = arith.constant 0.000000e+00 : f32
    %11 = vector.broadcast %cst_6 : f32 to vector<16x32xf32>
    %12 = arith.cmpf oge, %10, %11 : vector<16x32xf32>
    %cst_7 = arith.constant 2.000000e-01 : f32
    %13 = vector.broadcast %cst_7 : f32 to vector<16x32xf32>
    %14 = arith.mulf %13, %10 : vector<16x32xf32>
    %15 = arith.select %12, %10, %14 : vector<16x32xi1>, vector<16x32xf32>
    %16 = vector.extract_strided_slice %2 {offsets = [1, 0], sizes = [1, 32], strides = [1, 1]} : vector<32x32xf32> to vector<1x32xf32>
    %17 = vector.extract_strided_slice %2 {offsets = [2, 0], sizes = [1, 32], strides = [1, 1]} : vector<32x32xf32> to vector<1x32xf32>
    %cst_8 = arith.constant dense<0.000000e+00> : vector<32xf32>
    %18 = vector.multi_reduction <add>, %15, %cst_8 [0] : vector<16x32xf32> to vector<32xf32>
    %19 = vector.shape_cast %18 : vector<32xf32> to vector<1x32xf32>
    %cst_9 = arith.constant 1.600000e+01 : f32
    %20 = vector.broadcast %cst_9 : f32 to vector<1x32xf32>
    %21 = arith.divf %19, %20 : vector<1x32xf32>
    %22 = vector.broadcast %21 : vector<1x32xf32> to vector<16x32xf32>
    %23 = arith.subf %15, %22 : vector<16x32xf32>
    %24 = arith.mulf %23, %23 : vector<16x32xf32>
    %cst_10 = arith.constant dense<0.000000e+00> : vector<32xf32>
    %25 = vector.multi_reduction <add>, %24, %cst_10 [0] : vector<16x32xf32> to vector<32xf32>
    %26 = vector.shape_cast %25 : vector<32xf32> to vector<1x32xf32>
    %cst_11 = arith.constant 1.600000e+01 : f32
    %27 = vector.broadcast %cst_11 : f32 to vector<1x32xf32>
    %28 = arith.divf %26, %27 : vector<1x32xf32>
    %cst_12 = arith.constant 9.99999974E-6 : f32
    %29 = vector.broadcast %cst_12 : f32 to vector<1x32xf32>
    %30 = arith.addf %28, %29 : vector<1x32xf32>
    %31 = math.rsqrt %30 : vector<1x32xf32>
    %32 = arith.mulf %16, %31 : vector<1x32xf32>
    %33 = arith.mulf %21, %32 : vector<1x32xf32>
    %34 = arith.subf %17, %33 : vector<1x32xf32>
    %35 = vector.broadcast %32 : vector<1x32xf32> to vector<16x32xf32>
    %36 = arith.mulf %15, %35 : vector<16x32xf32>
    %37 = vector.broadcast %34 : vector<1x32xf32> to vector<16x32xf32>
    %38 = arith.addf %36, %37 : vector<16x32xf32>
    %39 = vector.extract_strided_slice %2 {offsets = [3, 0], sizes = [1, 32], strides = [1, 1]} : vector<32x32xf32> to vector<1x32xf32>
    %40 = arith.truncf %38 : vector<16x32xf32> to vector<16x32xbf16>
    %c1 = arith.constant 1 : index
    %c0_13 = arith.constant 0 : index
    %c0_14 = arith.constant 0 : index
    %41 = vector.load %arg1[%c1, %c0_13, %c0_14] : memref<7x32x32xbf16, #tpu.memory_space<vmem>>, vector<1x32x32xbf16>
    %42 = vector.shape_cast %41 : vector<1x32x32xbf16> to vector<32x32xbf16>
    %cst_15 = arith.constant dense<0.000000e+00> : vector<16x32xf32>
    %43 = tpu.matmul %40, %42, %cst_15 {dimension_numbers = #tpu.dot_dimension_numbers<[1], [0], [0], [1], [0, 0, 1, 1], [], []>} : vector<16x32xbf16>, vector<32x32xbf16>, vector<16x32xf32> -> vector<16x32xf32>
    %44 = vector.broadcast %39 : vector<1x32xf32> to vector<16x32xf32>
    %45 = arith.addf %43, %44 : vector<16x32xf32>
    %cst_16 = arith.constant 0.000000e+00 : f32
    %46 = vector.broadcast %cst_16 : f32 to vector<16x32xf32>
    %47 = arith.cmpf oge, %45, %46 : vector<16x32xf32>
    %cst_17 = arith.constant 2.000000e-01 : f32
    %48 = vector.broadcast %cst_17 : f32 to vector<16x32xf32>
    %49 = arith.mulf %48, %45 : vector<16x32xf32>
    %50 = arith.select %47, %45, %49 : vector<16x32xi1>, vector<16x32xf32>
    %51 = vector.extract_strided_slice %2 {offsets = [4, 0], sizes = [1, 32], strides = [1, 1]} : vector<32x32xf32> to vector<1x32xf32>
    %52 = vector.extract_strided_slice %2 {offsets = [5, 0], sizes = [1, 32], strides = [1, 1]} : vector<32x32xf32> to vector<1x32xf32>
    %cst_18 = arith.constant dense<0.000000e+00> : vector<32xf32>
    %53 = vector.multi_reduction <add>, %50, %cst_18 [0] : vector<16x32xf32> to vector<32xf32>
    %54 = vector.shape_cast %53 : vector<32xf32> to vector<1x32xf32>
    %cst_19 = arith.constant 1.600000e+01 : f32
    %55 = vector.broadcast %cst_19 : f32 to vector<1x32xf32>
    %56 = arith.divf %54, %55 : vector<1x32xf32>
    %57 = vector.broadcast %56 : vector<1x32xf32> to vector<16x32xf32>
    %58 = arith.subf %50, %57 : vector<16x32xf32>
    %59 = arith.mulf %58, %58 : vector<16x32xf32>
    %cst_20 = arith.constant dense<0.000000e+00> : vector<32xf32>
    %60 = vector.multi_reduction <add>, %59, %cst_20 [0] : vector<16x32xf32> to vector<32xf32>
    %61 = vector.shape_cast %60 : vector<32xf32> to vector<1x32xf32>
    %cst_21 = arith.constant 1.600000e+01 : f32
    %62 = vector.broadcast %cst_21 : f32 to vector<1x32xf32>
    %63 = arith.divf %61, %62 : vector<1x32xf32>
    %cst_22 = arith.constant 9.99999974E-6 : f32
    %64 = vector.broadcast %cst_22 : f32 to vector<1x32xf32>
    %65 = arith.addf %63, %64 : vector<1x32xf32>
    %66 = math.rsqrt %65 : vector<1x32xf32>
    %67 = arith.mulf %51, %66 : vector<1x32xf32>
    %68 = arith.mulf %56, %67 : vector<1x32xf32>
    %69 = arith.subf %52, %68 : vector<1x32xf32>
    %70 = vector.broadcast %67 : vector<1x32xf32> to vector<16x32xf32>
    %71 = arith.mulf %50, %70 : vector<16x32xf32>
    %72 = vector.broadcast %69 : vector<1x32xf32> to vector<16x32xf32>
    %73 = arith.addf %71, %72 : vector<16x32xf32>
    %74 = vector.extract_strided_slice %2 {offsets = [6, 0], sizes = [1, 32], strides = [1, 1]} : vector<32x32xf32> to vector<1x32xf32>
    %75 = arith.truncf %73 : vector<16x32xf32> to vector<16x32xbf16>
    %c2 = arith.constant 2 : index
    %c0_23 = arith.constant 0 : index
    %c0_24 = arith.constant 0 : index
    %76 = vector.load %arg1[%c2, %c0_23, %c0_24] : memref<7x32x32xbf16, #tpu.memory_space<vmem>>, vector<1x32x32xbf16>
    %77 = vector.shape_cast %76 : vector<1x32x32xbf16> to vector<32x32xbf16>
    %cst_25 = arith.constant dense<0.000000e+00> : vector<16x32xf32>
    %78 = tpu.matmul %75, %77, %cst_25 {dimension_numbers = #tpu.dot_dimension_numbers<[1], [0], [0], [1], [0, 0, 1, 1], [], []>} : vector<16x32xbf16>, vector<32x32xbf16>, vector<16x32xf32> -> vector<16x32xf32>
    %79 = vector.broadcast %74 : vector<1x32xf32> to vector<16x32xf32>
    %80 = arith.addf %78, %79 : vector<16x32xf32>
    %cst_26 = arith.constant 0.000000e+00 : f32
    %81 = vector.broadcast %cst_26 : f32 to vector<16x32xf32>
    %82 = arith.cmpf oge, %80, %81 : vector<16x32xf32>
    %cst_27 = arith.constant 2.000000e-01 : f32
    %83 = vector.broadcast %cst_27 : f32 to vector<16x32xf32>
    %84 = arith.mulf %83, %80 : vector<16x32xf32>
    %85 = arith.select %82, %80, %84 : vector<16x32xi1>, vector<16x32xf32>
    %86 = vector.extract_strided_slice %2 {offsets = [7, 0], sizes = [1, 32], strides = [1, 1]} : vector<32x32xf32> to vector<1x32xf32>
    %87 = vector.extract_strided_slice %2 {offsets = [8, 0], sizes = [1, 32], strides = [1, 1]} : vector<32x32xf32> to vector<1x32xf32>
    %cst_28 = arith.constant dense<0.000000e+00> : vector<32xf32>
    %88 = vector.multi_reduction <add>, %85, %cst_28 [0] : vector<16x32xf32> to vector<32xf32>
    %89 = vector.shape_cast %88 : vector<32xf32> to vector<1x32xf32>
    %cst_29 = arith.constant 1.600000e+01 : f32
    %90 = vector.broadcast %cst_29 : f32 to vector<1x32xf32>
    %91 = arith.divf %89, %90 : vector<1x32xf32>
    %92 = vector.broadcast %91 : vector<1x32xf32> to vector<16x32xf32>
    %93 = arith.subf %85, %92 : vector<16x32xf32>
    %94 = arith.mulf %93, %93 : vector<16x32xf32>
    %cst_30 = arith.constant dense<0.000000e+00> : vector<32xf32>
    %95 = vector.multi_reduction <add>, %94, %cst_30 [0] : vector<16x32xf32> to vector<32xf32>
    %96 = vector.shape_cast %95 : vector<32xf32> to vector<1x32xf32>
    %cst_31 = arith.constant 1.600000e+01 : f32
    %97 = vector.broadcast %cst_31 : f32 to vector<1x32xf32>
    %98 = arith.divf %96, %97 : vector<1x32xf32>
    %cst_32 = arith.constant 9.99999974E-6 : f32
    %99 = vector.broadcast %cst_32 : f32 to vector<1x32xf32>
    %100 = arith.addf %98, %99 : vector<1x32xf32>
    %101 = math.rsqrt %100 : vector<1x32xf32>
    %102 = arith.mulf %86, %101 : vector<1x32xf32>
    %103 = arith.mulf %91, %102 : vector<1x32xf32>
    %104 = arith.subf %87, %103 : vector<1x32xf32>
    %105 = vector.broadcast %102 : vector<1x32xf32> to vector<16x32xf32>
    %106 = arith.mulf %85, %105 : vector<16x32xf32>
    %107 = vector.broadcast %104 : vector<1x32xf32> to vector<16x32xf32>
    %108 = arith.addf %106, %107 : vector<16x32xf32>
    %109 = vector.extract_strided_slice %108 {offsets = [0, 0], sizes = [16, 8], strides = [1, 1]} : vector<16x32xf32> to vector<16x8xf32>
    %110 = vector.extract_strided_slice %108 {offsets = [0, 8], sizes = [16, 8], strides = [1, 1]} : vector<16x32xf32> to vector<16x8xf32>
    %c0_33 = arith.constant 0 : index
    %c32 = arith.constant 32 : index
    %111 = vector.load %arg0[%c0_33, %c32] : memref<16x40xf32, #tpu.memory_space<vmem>>, vector<16x8xf32>
    %cst_34 = arith.constant 5.000000e-01 : f32
    %112 = vector.broadcast %cst_34 : f32 to vector<16x8xf32>
    %113 = arith.mulf %112, %110 : vector<16x8xf32>
    %114 = math.exp %113 : vector<16x8xf32>
    %115 = arith.mulf %114, %111 : vector<16x8xf32>
    %116 = arith.addf %109, %115 : vector<16x8xf32>
    %cst_35 = arith.constant 0.000000e+00 : f32
    %117 = vector.broadcast %cst_35 : f32 to vector<16x24xf32>
    %118 = tpu.concatenate %116, %117 in 1 : vector<16x8xf32>, vector<16x24xf32> -> vector<16x32xf32>
    %119 = vector.extract_strided_slice %2 {offsets = [9, 0], sizes = [1, 32], strides = [1, 1]} : vector<32x32xf32> to vector<1x32xf32>
    %120 = arith.truncf %118 : vector<16x32xf32> to vector<16x32xbf16>
    %c3 = arith.constant 3 : index
    %c0_36 = arith.constant 0 : index
    %c0_37 = arith.constant 0 : index
    %121 = vector.load %arg1[%c3, %c0_36, %c0_37] : memref<7x32x32xbf16, #tpu.memory_space<vmem>>, vector<1x32x32xbf16>
    %122 = vector.shape_cast %121 : vector<1x32x32xbf16> to vector<32x32xbf16>
    %cst_38 = arith.constant dense<0.000000e+00> : vector<16x32xf32>
    %123 = tpu.matmul %120, %122, %cst_38 {dimension_numbers = #tpu.dot_dimension_numbers<[1], [0], [0], [1], [0, 0, 1, 1], [], []>} : vector<16x32xbf16>, vector<32x32xbf16>, vector<16x32xf32> -> vector<16x32xf32>
    %124 = vector.broadcast %119 : vector<1x32xf32> to vector<16x32xf32>
    %125 = arith.addf %123, %124 : vector<16x32xf32>
    %cst_39 = arith.constant 0.000000e+00 : f32
    %126 = vector.broadcast %cst_39 : f32 to vector<16x32xf32>
    %127 = arith.cmpf oge, %125, %126 : vector<16x32xf32>
    %cst_40 = arith.constant 2.000000e-01 : f32
    %128 = vector.broadcast %cst_40 : f32 to vector<16x32xf32>
    %129 = arith.mulf %128, %125 : vector<16x32xf32>
    %130 = arith.select %127, %125, %129 : vector<16x32xi1>, vector<16x32xf32>
    %131 = vector.extract_strided_slice %2 {offsets = [10, 0], sizes = [1, 32], strides = [1, 1]} : vector<32x32xf32> to vector<1x32xf32>
    %132 = vector.extract_strided_slice %2 {offsets = [11, 0], sizes = [1, 32], strides = [1, 1]} : vector<32x32xf32> to vector<1x32xf32>
    %cst_41 = arith.constant dense<0.000000e+00> : vector<32xf32>
    %133 = vector.multi_reduction <add>, %130, %cst_41 [0] : vector<16x32xf32> to vector<32xf32>
    %134 = vector.shape_cast %133 : vector<32xf32> to vector<1x32xf32>
    %cst_42 = arith.constant 1.600000e+01 : f32
    %135 = vector.broadcast %cst_42 : f32 to vector<1x32xf32>
    %136 = arith.divf %134, %135 : vector<1x32xf32>
    %137 = vector.broadcast %136 : vector<1x32xf32> to vector<16x32xf32>
    %138 = arith.subf %130, %137 : vector<16x32xf32>
    %139 = arith.mulf %138, %138 : vector<16x32xf32>
    %cst_43 = arith.constant dense<0.000000e+00> : vector<32xf32>
    %140 = vector.multi_reduction <add>, %139, %cst_43 [0] : vector<16x32xf32> to vector<32xf32>
    %141 = vector.shape_cast %140 : vector<32xf32> to vector<1x32xf32>
    %cst_44 = arith.constant 1.600000e+01 : f32
    %142 = vector.broadcast %cst_44 : f32 to vector<1x32xf32>
    %143 = arith.divf %141, %142 : vector<1x32xf32>
    %cst_45 = arith.constant 9.99999974E-6 : f32
    %144 = vector.broadcast %cst_45 : f32 to vector<1x32xf32>
    %145 = arith.addf %143, %144 : vector<1x32xf32>
    %146 = math.rsqrt %145 : vector<1x32xf32>
    %147 = arith.mulf %131, %146 : vector<1x32xf32>
    %148 = arith.mulf %136, %147 : vector<1x32xf32>
    %149 = arith.subf %132, %148 : vector<1x32xf32>
    %150 = vector.broadcast %147 : vector<1x32xf32> to vector<16x32xf32>
    %151 = arith.mulf %130, %150 : vector<16x32xf32>
    %152 = vector.broadcast %149 : vector<1x32xf32> to vector<16x32xf32>
    %153 = arith.addf %151, %152 : vector<16x32xf32>
    %154 = vector.extract_strided_slice %2 {offsets = [12, 0], sizes = [1, 32], strides = [1, 1]} : vector<32x32xf32> to vector<1x32xf32>
    %155 = arith.truncf %153 : vector<16x32xf32> to vector<16x32xbf16>
    %c4 = arith.constant 4 : index
    %c0_46 = arith.constant 0 : index
    %c0_47 = arith.constant 0 : index
    %156 = vector.load %arg1[%c4, %c0_46, %c0_47] : memref<7x32x32xbf16, #tpu.memory_space<vmem>>, vector<1x32x32xbf16>
    %157 = vector.shape_cast %156 : vector<1x32x32xbf16> to vector<32x32xbf16>
    %cst_48 = arith.constant dense<0.000000e+00> : vector<16x32xf32>
    %158 = tpu.matmul %155, %157, %cst_48 {dimension_numbers = #tpu.dot_dimension_numbers<[1], [0], [0], [1], [0, 0, 1, 1], [], []>} : vector<16x32xbf16>, vector<32x32xbf16>, vector<16x32xf32> -> vector<16x32xf32>
    %159 = vector.broadcast %154 : vector<1x32xf32> to vector<16x32xf32>
    %160 = arith.addf %158, %159 : vector<16x32xf32>
    %cst_49 = arith.constant 0.000000e+00 : f32
    %161 = vector.broadcast %cst_49 : f32 to vector<16x32xf32>
    %162 = arith.cmpf oge, %160, %161 : vector<16x32xf32>
    %cst_50 = arith.constant 2.000000e-01 : f32
    %163 = vector.broadcast %cst_50 : f32 to vector<16x32xf32>
    %164 = arith.mulf %163, %160 : vector<16x32xf32>
    %165 = arith.select %162, %160, %164 : vector<16x32xi1>, vector<16x32xf32>
    %166 = vector.extract_strided_slice %2 {offsets = [13, 0], sizes = [1, 32], strides = [1, 1]} : vector<32x32xf32> to vector<1x32xf32>
    %167 = vector.extract_strided_slice %2 {offsets = [14, 0], sizes = [1, 32], strides = [1, 1]} : vector<32x32xf32> to vector<1x32xf32>
    %cst_51 = arith.constant dense<0.000000e+00> : vector<32xf32>
    %168 = vector.multi_reduction <add>, %165, %cst_51 [0] : vector<16x32xf32> to vector<32xf32>
    %169 = vector.shape_cast %168 : vector<32xf32> to vector<1x32xf32>
    %cst_52 = arith.constant 1.600000e+01 : f32
    %170 = vector.broadcast %cst_52 : f32 to vector<1x32xf32>
    %171 = arith.divf %169, %170 : vector<1x32xf32>
    %172 = vector.broadcast %171 : vector<1x32xf32> to vector<16x32xf32>
    %173 = arith.subf %165, %172 : vector<16x32xf32>
    %174 = arith.mulf %173, %173 : vector<16x32xf32>
    %cst_53 = arith.constant dense<0.000000e+00> : vector<32xf32>
    %175 = vector.multi_reduction <add>, %174, %cst_53 [0] : vector<16x32xf32> to vector<32xf32>
    %176 = vector.shape_cast %175 : vector<32xf32> to vector<1x32xf32>
    %cst_54 = arith.constant 1.600000e+01 : f32
    %177 = vector.broadcast %cst_54 : f32 to vector<1x32xf32>
    %178 = arith.divf %176, %177 : vector<1x32xf32>
    %cst_55 = arith.constant 9.99999974E-6 : f32
    %179 = vector.broadcast %cst_55 : f32 to vector<1x32xf32>
    %180 = arith.addf %178, %179 : vector<1x32xf32>
    %181 = math.rsqrt %180 : vector<1x32xf32>
    %182 = arith.mulf %166, %181 : vector<1x32xf32>
    %183 = arith.mulf %171, %182 : vector<1x32xf32>
    %184 = arith.subf %167, %183 : vector<1x32xf32>
    %185 = vector.broadcast %182 : vector<1x32xf32> to vector<16x32xf32>
    %186 = arith.mulf %165, %185 : vector<16x32xf32>
    %187 = vector.broadcast %184 : vector<1x32xf32> to vector<16x32xf32>
    %188 = arith.addf %186, %187 : vector<16x32xf32>
    %189 = vector.extract_strided_slice %2 {offsets = [15, 0], sizes = [1, 32], strides = [1, 1]} : vector<32x32xf32> to vector<1x32xf32>
    %190 = arith.truncf %188 : vector<16x32xf32> to vector<16x32xbf16>
    %c5 = arith.constant 5 : index
    %c0_56 = arith.constant 0 : index
    %c0_57 = arith.constant 0 : index
    %191 = vector.load %arg1[%c5, %c0_56, %c0_57] : memref<7x32x32xbf16, #tpu.memory_space<vmem>>, vector<1x32x32xbf16>
    %192 = vector.shape_cast %191 : vector<1x32x32xbf16> to vector<32x32xbf16>
    %cst_58 = arith.constant dense<0.000000e+00> : vector<16x32xf32>
    %193 = tpu.matmul %190, %192, %cst_58 {dimension_numbers = #tpu.dot_dimension_numbers<[1], [0], [0], [1], [0, 0, 1, 1], [], []>} : vector<16x32xbf16>, vector<32x32xbf16>, vector<16x32xf32> -> vector<16x32xf32>
    %194 = vector.broadcast %189 : vector<1x32xf32> to vector<16x32xf32>
    %195 = arith.addf %193, %194 : vector<16x32xf32>
    %196 = math.tanh %195 : vector<16x32xf32>
    %cst_59 = arith.constant 1.000000e+00 : f32
    %197 = vector.broadcast %cst_59 : f32 to vector<16x32xf32>
    %198 = arith.mulf %196, %197 : vector<16x32xf32>
    %199 = vector.extract_strided_slice %108 {offsets = [0, 0], sizes = [16, 16], strides = [1, 1]} : vector<16x32xf32> to vector<16x16xf32>
    %200 = tpu.concatenate %116, %199, %198 in 1 : vector<16x8xf32>, vector<16x16xf32>, vector<16x32xf32> -> vector<16x56xf32>
    %c0_60 = arith.constant 0 : index
    %c0_61 = arith.constant 0 : index
    %201 = vector.load %arg2[%c0_60, %c0_61] : memref<16x56xf32, #tpu.memory_space<vmem>>, vector<16x56xf32>
    tpu.vector_store %arg2[%c0_60, %c0_61], %200 {strides = array<i32>} : memref<16x56xf32, #tpu.memory_space<vmem>>, vector<16x56xf32>,
    return
  }
}

</mosaic_0001>

<llo_original>
// kernel: vae_forward.1
$region0: #{vae_forward.1}
  #allocation0 [shape = 'u32[]', space=smem, size = 0x4, offset = 0x4, fixed_abs, tag = 'smem constant byte address 0x4 - core index']
  #allocation1 [shape = 'u32[72,128]{1,0:T(1,128)}', space=vmem, size = 0x9000, scoped, tag = 'internal scratch']
  %s0 = inlined_call_operand.vmem [shape: f32[16,40], index: 0, kind: input, shape index: {}]
  %s1 = inlined_call_operand.hbm [shape: bf16[7,32,32], index: 1, kind: input, shape index: {}]
  %s2 = inlined_call_operand.vmem [shape: f32[16,56], index: 2, kind: output, shape index: {}]
  %s3 = sld [smem:[#allocation0]]
  $region22: #{vae_forward.1} parent=0
    _
  %s5 = ssub.s32 1, %s3
  %s6 = scalar_select 0, %s5, %s3
  $region1: #{vae_forward.1} parent=0
    #allocation2 [shape = 'u8[57344]{0}', space=vmem, size = 0xe000, scoped, tag = 'input window, operand 1, single buffered']
    #allocation3 [shape = 's32[1]{0}', space=sflag, size = 0x4, scoped, tag = 'scoped memory for vae_forward.1']
    %7 = vsyncpa [#allocation3], 0
    // Predicated region
    $region2: #{vae_forward.1} parent=1 // pred_check
      _
    $region3: #{vae_forward.1} parent=1 // pred_check_branch
      %9 = sbr.rel (0) target = $region5
    $region4: #{vae_forward.1} parent=1 // pred_region
      _
    $region5: #{vae_forward.1} parent=1 // pred_fallthru
      _
    // Predicated region
    $region6: #{vae_forward.1} parent=1 // pred_check
      _
    $region7: #{vae_forward.1} parent=1 // pred_check_branch
      %11 = sbr.rel (0) target = $region9
    $region8: #{vae_forward.1} parent=1 // pred_region
      %13 = vsyncadd [#allocation3], 0
      %s14 = sshll.u32 %s1, 4
      %s15 = int_to_ptr.hbm [resolvable:$true] %s14
      %s16 = sshll.u32 [#allocation2], 4
      %s17 = int_to_ptr.vmem [resolvable:$true] %s16
      %22 = dma.hbm_to_vmem [thread:$0]  %s15, 1792, %s17, [#allocation3], 64, 64, 4
    $region9: #{vae_forward.1} parent=1 // pred_fallthru
      _
    // Predicated region
    $region10: #{vae_forward.1} parent=1 // pred_check
      _
    $region11: #{vae_forward.1} parent=1 // pred_check_branch
      %24 = sbr.rel (0) target = $region13
    $region12: #{vae_forward.1} parent=1 // pred_region
      %26 = dma.done [#allocation3], 1792
    $region13: #{vae_forward.1} parent=1 // pred_fallthru
      _
    %s28 = scalar_lea.vmem [#allocation2], 96
    %v29 = vld [vmem:[%s28] sm:$0xf]
    %v30 = vld [vmem:[%s28 + $0x4] sm:$0xf]
    %v31 = vunpack.c.l.bf16 %v29
    %v32 = vunpack.c.l.bf16 %v30
    %v33 = vld [vmem:[%s0] sm:$0xff]
    %v34 = vld [vmem:[%s0 + $0x8] sm:$0xff]
    %v35 = vpack.c.bf16 %v34, %v33
    %v36 = vld [vmem:[#allocation2] sm:$0xf]
    %v37 = vld [vmem:[#allocation2 + $0x4] sm:$0xf]
    %v38 = vld [vmem:[#allocation2 + $0x8] sm:$0xf]
    %v39 = vld [vmem:[#allocation2 + $0xc] sm:$0xf]
    %v40 = vperm.slane %v31, 0
    %v45 = vunpack.c.l.b16 %v36
    %v46 = vunpack.c.l.b16 %v37
    %v47 = vunpack.c.l.b16 %v38
    %v48 = vunpack.c.l.b16 %v39
    %v49 = vpack.c.b16 %v46, %v45
    %v50 = vpack.c.b16 %v48, %v47
    %vm53 = vcmask 261120
    %v55 = vsel %vm53, %v35, 0
    %57 = vmatpush.bf16.msra.mxu0 0
    %58 = vmatpush.bf16.msra.mxu0 0
    %59 = vmatpush.bf16.msra.mxu0 0
    %60 = vmatpush.bf16.msra.mxu0 0
    %61 = vmatpush.bf16.msra.mxu0 0
    %62 = vmatpush.bf16.msra.mxu0 0
    %63 = vmatpush.bf16.msra.mxu0 %v50
    %64 = vmatpush.bf16.msra.mxu0 %v49
    %65 = vmatmul.bf16.gmra.mxu0 %v55
    %v66 = vpop.f32.mrf.mxu0
    %v67 = vadd.f32 %v40, %v66
    %v68 = vpop.f32.mrf.mxu0
    %v69 = vadd.f32 %v40, %v68
    %70 = vdwg.mxu0
    %vm71 = vcmp.ge.f32.partialorder %v67, 0.0
    %vm72 = vcmp.ge.f32.partialorder %v69, 0.0
    %v73 = vmul.f32 %v67, 0.2
    %v74 = vmul.f32 %v69, 0.2
    %v75 = vsel %vm71, %v67, %v73
    %v76 = vsel %vm72, %v69, %v74
    %v77 = vsel %vm53, %v75, 0.0
    %v78 = vsel %vm53, %v76, 0.0
    %v79 = vadd.f32 %v77, %v78
    %v80 = vrot.slane %v79, 4
    %v81 = vadd.f32 %v79, %v80
    %v82 = vrot.slane %v81, 2
    %v83 = vadd.f32 %v81, %v82
    %v84 = vrot.slane %v83, 1
    %v85 = vadd.f32 %v83, %v84
    %v86 = vrcp.pop 16.0
    %v87 = vmul.f32 16.0, %v86
    %v88 = vsub.f32 1.0, %v87
    %v89 = vmul.f32 %v86, %v88
    %v90 = vadd.f32 %v86, %v89
    %vm91 = vweird.f32 %v86
    %v92 = vsel %vm91, %v86, %v90
    %v93 = vmul.f32 %v85, %v92
    %v94 = vsub.f32 %v75, %v93
    %v95 = vsub.f32 %v76, %v93
    %v96 = vmul.f32 %v94, %v94
    %v97 = vmul.f32 %v95, %v95
    %v98 = vsel %vm53, %v96, 0.0
    %v99 = vsel %vm53, %v97, 0.0
    %v100 = vadd.f32 %v98, %v99
    %v101 = vrot.slane %v100, 4
    %v102 = vadd.f32 %v100, %v101
    %v103 = vrot.slane %v102, 2
    %v104 = vadd.f32 %v102, %v103
    %v105 = vrot.slane %v104, 1
    %v106 = vadd.f32 %v104, %v105
    %v107 = vmul.f32 %v106, %v92
    %v108 = vadd.f32 %v107, 1e-05
    %v109 = vrsqrt.pop %v108
    %v110 = vmul.f32 %v109, %v108
    %v111 = vmul.f32 %v110, %v109
    %v112 = vmul.f32 0.5, %v111
    %v113 = vsub.f32 1.5, %v112
    %v114 = vmul.f32 %v109, %v113
    %vm115 = vweird.f32 %v108
    %vm116 = vweird.f32 %v109
    %vm117 = vmor %vm115, %vm116
    %v118 = vsel %vm117, %v109, %v114
    %v119 = vmul.f32 %v31, %v118
    %v120 = vmul.f32 %v93, %v119
    %v122 = vrot.slane %v120, 7
    %v124 = vsub.f32 %v31, %v122
    %v125 = vperm.slane %v119, 1
    %v126 = vmul.f32 %v75, %v125
    %v127 = vmul.f32 %v76, %v125
    %v128 = vperm.slane %v124, 2
    %v129 = vadd.f32 %v126, %v128
    %v130 = vadd.f32 %v127, %v128
    %v131 = vpack.c.bf16 %v130, %v129
    %s132 = scalar_lea.vmem [#allocation2], 16
    %v133 = vld [vmem:[%s132] sm:$0xf]
    %v134 = vld [vmem:[%s132 + $0x4] sm:$0xf]
    %v135 = vld [vmem:[%s132 + $0x8] sm:$0xf]
    %v136 = vld [vmem:[%s132 + $0xc] sm:$0xf]
    %v137 = vperm.slane %v31, 3
    %v142 = vunpack.c.l.b16 %v133
    %v143 = vunpack.c.l.b16 %v134
    %v144 = vunpack.c.l.b16 %v135
    %v145 = vunpack.c.l.b16 %v136
    %v146 = vpack.c.b16 %v143, %v142
    %v147 = vpack.c.b16 %v145, %v144
    %v151 = vsel %vm53, %v131, 0
    %153 = vmatpush.bf16.msra.mxu0 0
    %154 = vmatpush.bf16.msra.mxu0 0
    %155 = vmatpush.bf16.msra.mxu0 0
    %156 = vmatpush.bf16.msra.mxu0 0
    %157 = vmatpush.bf16.msra.mxu0 0
    %158 = vmatpush.bf16.msra.mxu0 0
    %159 = vmatpush.bf16.msra.mxu0 %v147
    %160 = vmatpush.bf16.msra.mxu0 %v146
    %161 = vmatmul.bf16.gmra.mxu0 %v151
    %v162 = vpop.f32.mrf.mxu0
    %v163 = vadd.f32 %v137, %v162
    %v164 = vpop.f32.mrf.mxu0
    %v165 = vadd.f32 %v137, %v164
    %166 = vdwg.mxu0
    %vm167 = vcmp.ge.f32.partialorder %v163, 0.0
    %vm168 = vcmp.ge.f32.partialorder %v165, 0.0
    %v169 = vmul.f32 %v163, 0.2
    %v170 = vmul.f32 %v165, 0.2
    %v171 = vsel %vm167, %v163, %v169
    %v172 = vsel %vm168, %v165, %v170
    %v173 = vsel %vm53, %v171, 0.0
    %v174 = vsel %vm53, %v172, 0.0
    %v175 = vadd.f32 %v173, %v174
    %v176 = vrot.slane %v175, 4
    %v177 = vadd.f32 %v175, %v176
    %v178 = vrot.slane %v177, 2
    %v179 = vadd.f32 %v177, %v178
    %v180 = vrot.slane %v179, 1
    %v181 = vadd.f32 %v179, %v180
    %v182 = vmul.f32 %v181, %v92
    %v183 = vsub.f32 %v171, %v182
    %v184 = vsub.f32 %v172, %v182
    %v185 = vmul.f32 %v183, %v183
    %v186 = vmul.f32 %v184, %v184
    %v187 = vsel %vm53, %v185, 0.0
    %v188 = vsel %vm53, %v186, 0.0
    %v189 = vadd.f32 %v187, %v188
    %v190 = vrot.slane %v189, 4
    %v191 = vadd.f32 %v189, %v190
    %v192 = vrot.slane %v191, 2
    %v193 = vadd.f32 %v191, %v192
    %v194 = vrot.slane %v193, 1
    %v195 = vadd.f32 %v193, %v194
    %v196 = vmul.f32 %v195, %v92
    %v197 = vadd.f32 %v196, 1e-05
    %v198 = vrsqrt.pop %v197
    %v199 = vmul.f32 %v198, %v197
    %v200 = vmul.f32 %v199, %v198
    %v201 = vmul.f32 0.5, %v200
    %v202 = vsub.f32 1.5, %v201
    %v203 = vmul.f32 %v198, %v202
    %vm204 = vweird.f32 %v197
    %vm205 = vweird.f32 %v198
    %vm206 = vmor %vm204, %vm205
    %v207 = vsel %vm206, %v198, %v203
    %v208 = vmul.f32 %v31, %v207
    %v209 = vmul.f32 %v182, %v208
    %v211 = vrot.slane %v209, 7
    %v213 = vsub.f32 %v31, %v211
    %v214 = vperm.slane %v208, 4
    %v215 = vmul.f32 %v171, %v214
    %v216 = vmul.f32 %v172, %v214
    %v217 = vperm.slane %v213, 5
    %v218 = vadd.f32 %v215, %v217
    %v219 = vadd.f32 %v216, %v217
    %v220 = vpack.c.bf16 %v219, %v218
    %s221 = scalar_lea.vmem [#allocation2], 32
    %v222 = vld [vmem:[%s221] sm:$0xf]
    %v223 = vld [vmem:[%s221 + $0x4] sm:$0xf]
    %v224 = vld [vmem:[%s221 + $0x8] sm:$0xf]
    %v225 = vld [vmem:[%s221 + $0xc] sm:$0xf]
    %v226 = vperm.slane %v31, 6
    %v231 = vunpack.c.l.b16 %v222
    %v232 = vunpack.c.l.b16 %v223
    %v233 = vunpack.c.l.b16 %v224
    %v234 = vunpack.c.l.b16 %v225
    %v235 = vpack.c.b16 %v232, %v231
    %v236 = vpack.c.b16 %v234, %v233
    %v240 = vsel %vm53, %v220, 0
    %242 = vmatpush.bf16.msra.mxu0 0
    %243 = vmatpush.bf16.msra.mxu0 0
    %244 = vmatpush.bf16.msra.mxu0 0
    %245 = vmatpush.bf16.msra.mxu0 0
    %246 = vmatpush.bf16.msra.mxu0 0
    %247 = vmatpush.bf16.msra.mxu0 0
    %248 = vmatpush.bf16.msra.mxu0 %v236
    %249 = vmatpush.bf16.msra.mxu0 %v235
    %250 = vmatmul.bf16.gmra.mxu0 %v240
    %v251 = vpop.f32.mrf.mxu0
    %v252 = vadd.f32 %v226, %v251
    %v253 = vpop.f32.mrf.mxu0
    %v254 = vadd.f32 %v226, %v253
    %255 = vdwg.mxu0
    %vm256 = vcmp.ge.f32.partialorder %v252, 0.0
    %vm257 = vcmp.ge.f32.partialorder %v254, 0.0
    %v258 = vmul.f32 %v252, 0.2
    %v259 = vmul.f32 %v254, 0.2
    %v260 = vsel %vm256, %v252, %v258
    %v261 = vsel %vm257, %v254, %v259
    %v262 = vsel %vm53, %v260, 0.0
    %v263 = vsel %vm53, %v261, 0.0
    %v264 = vadd.f32 %v262, %v263
    %v265 = vrot.slane %v264, 4
    %v266 = vadd.f32 %v264, %v265
    %v267 = vrot.slane %v266, 2
    %v268 = vadd.f32 %v266, %v267
    %v269 = vrot.slane %v268, 1
    %v270 = vadd.f32 %v268, %v269
    %v271 = vmul.f32 %v270, %v92
    %v272 = vsub.f32 %v260, %v271
    %v273 = vsub.f32 %v261, %v271
    %v274 = vmul.f32 %v272, %v272
    %v275 = vmul.f32 %v273, %v273
    %v276 = vsel %vm53, %v274, 0.0
    %v277 = vsel %vm53, %v275, 0.0
    %v278 = vadd.f32 %v276, %v277
    %v279 = vrot.slane %v278, 4
    %v280 = vadd.f32 %v278, %v279
    %v281 = vrot.slane %v280, 2
    %v282 = vadd.f32 %v280, %v281
    %v283 = vrot.slane %v282, 1
    %v284 = vadd.f32 %v282, %v283
    %v285 = vmul.f32 %v284, %v92
    %v286 = vadd.f32 %v285, 1e-05
    %v287 = vrsqrt.pop %v286
    %v288 = vmul.f32 %v287, %v286
    %v289 = vmul.f32 %v288, %v287
    %v290 = vmul.f32 0.5, %v289
    %v291 = vsub.f32 1.5, %v290
    %v292 = vmul.f32 %v287, %v291
    %vm293 = vweird.f32 %v286
    %vm294 = vweird.f32 %v287
    %vm295 = vmor %vm293, %vm294
    %v296 = vsel %vm295, %v287, %v292
    %v297 = vmul.f32 %v31, %v296
    %v298 = vmul.f32 %v271, %v297
    %v300 = vrot.slane %v298, 7
    %v302 = vsub.f32 %v32, %v300
    %v303 = vperm.slane %v297, 7
    %v304 = vmul.f32 %v260, %v303
    %v305 = vmul.f32 %v261, %v303
    %v306 = vperm.slane %v302, 0
    %v307 = vadd.f32 %v304, %v306
    %v308 = vadd.f32 %v305, %v306
    %v309 = vmul.f32 %v307, 0.5
    %v310 = vmul.f32 %v308, 0.5
    %v311 = vmul.f32 %v309, 1.442695
    %v312 = vpow.pop %v311
    %v313 = vmul.f32 %v310, 1.442695
    %v314 = vpow.pop %v313
    %317 = vrot.lane.b32.xlu0 %v33, 104
    %v318 = vpop.permute.xlu0 %317
    %319 = vrot.lane.b32.xlu0 %v34, 104
    %v320 = vpop.permute.xlu0 %319
    %v323 = vmul.f32 %v312, %v318
    %v324 = vmul.f32 %v314, %v320
    %327 = vrot.lane.b32.xlu0 %v323, 120
    %v328 = vpop.permute.xlu0 %327
    %329 = vrot.lane.b32.xlu0 %v324, 120
    %v330 = vpop.permute.xlu0 %329
    %v333 = vadd.f32 %v307, %v328
    %v334 = vadd.f32 %v308, %v330
    %vm335 = vcmask 64512
    %v336 = vsel %vm335, %v333, 0.0
    %v337 = vsel %vm335, %v334, 0.0
    %v338 = vpack.c.bf16 %v337, %v336
    %s339 = scalar_lea.vmem [#allocation2], 48
    %v340 = vld [vmem:[%s339] sm:$0xf]
    %v341 = vld [vmem:[%s339 + $0x4] sm:$0xf]
    %v342 = vld [vmem:[%s339 + $0x8] sm:$0xf]
    %v343 = vld [vmem:[%s339 + $0xc] sm:$0xf]
    %v344 = vperm.slane %v32, 1
    %v349 = vunpack.c.l.b16 %v340
    %v350 = vunpack.c.l.b16 %v341
    %v351 = vunpack.c.l.b16 %v342
    %v352 = vunpack.c.l.b16 %v343
    %v353 = vpack.c.b16 %v350, %v349
    %v354 = vpack.c.b16 %v352, %v351
    %v358 = vsel %vm53, %v338, 0
    %360 = vmatpush.bf16.msra.mxu0 0
    %361 = vmatpush.bf16.msra.mxu0 0
    %362 = vmatpush.bf16.msra.mxu0 0
    %363 = vmatpush.bf16.msra.mxu0 0
    %364 = vmatpush.bf16.msra.mxu0 0
    %365 = vmatpush.bf16.msra.mxu0 0
    %366 = vmatpush.bf16.msra.mxu0 %v354
    %367 = vmatpush.bf16.msra.mxu0 %v353
    %368 = vmatmul.bf16.gmra.mxu0 %v358
    %v369 = vpop.f32.mrf.mxu0
    %v370 = vadd.f32 %v344, %v369
    %v371 = vpop.f32.mrf.mxu0
    %v372 = vadd.f32 %v344, %v371
    %373 = vdwg.mxu0
    %vm374 = vcmp.ge.f32.partialorder %v370, 0.0
    %vm375 = vcmp.ge.f32.partialorder %v372, 0.0
    %v376 = vmul.f32 %v370, 0.2
    %v377 = vmul.f32 %v372, 0.2
    %v378 = vsel %vm374, %v370, %v376
    %v379 = vsel %vm375, %v372, %v377
    %v380 = vsel %vm53, %v378, 0.0
    %v381 = vsel %vm53, %v379, 0.0
    %v382 = vadd.f32 %v380, %v381
    %v383 = vrot.slane %v382, 4
    %v384 = vadd.f32 %v382, %v383
    %v385 = vrot.slane %v384, 2
    %v386 = vadd.f32 %v384, %v385
    %v387 = vrot.slane %v386, 1
    %v388 = vadd.f32 %v386, %v387
    %v389 = vmul.f32 %v388, %v92
    %v390 = vsub.f32 %v378, %v389
    %v391 = vsub.f32 %v379, %v389
    %v392 = vmul.f32 %v390, %v390
    %v393 = vmul.f32 %v391, %v391
    %v394 = vsel %vm53, %v392, 0.0
    %v395 = vsel %vm53, %v393, 0.0
    %v396 = vadd.f32 %v394, %v395
    %v397 = vrot.slane %v396, 4
    %v398 = vadd.f32 %v396, %v397
    %v399 = vrot.slane %v398, 2
    %v400 = vadd.f32 %v398, %v399
    %v401 = vrot.slane %v400, 1
    %v402 = vadd.f32 %v400, %v401
    %v403 = vmul.f32 %v402, %v92
    %v404 = vadd.f32 %v403, 1e-05
    %v405 = vrsqrt.pop %v404
    %v406 = vmul.f32 %v405, %v404
    %v407 = vmul.f32 %v406, %v405
    %v408 = vmul.f32 0.5, %v407
    %v409 = vsub.f32 1.5, %v408
    %v410 = vmul.f32 %v405, %v409
    %vm411 = vweird.f32 %v404
    %vm412 = vweird.f32 %v405
    %vm413 = vmor %vm411, %vm412
    %v414 = vsel %vm413, %v405, %v410
    %v415 = vmul.f32 %v32, %v414
    %v416 = vmul.f32 %v389, %v415
    %v418 = vrot.slane %v416, 7
    %v420 = vsub.f32 %v32, %v418
    %v421 = vperm.slane %v415, 2
    %v422 = vmul.f32 %v378, %v421
    %v423 = vmul.f32 %v379, %v421
    %v424 = vperm.slane %v420, 3
    %v425 = vadd.f32 %v422, %v424
    %v426 = vadd.f32 %v423, %v424
    %v427 = vpack.c.bf16 %v426, %v425
    %s428 = scalar_lea.vmem [#allocation2], 64
    %v429 = vld [vmem:[%s428] sm:$0xf]
    %v430 = vld [vmem:[%s428 + $0x4] sm:$0xf]
    %v431 = vld [vmem:[%s428 + $0x8] sm:$0xf]
    %v432 = vld [vmem:[%s428 + $0xc] sm:$0xf]
    %v433 = vperm.slane %v32, 4
    %v438 = vunpack.c.l.b16 %v429
    %v439 = vunpack.c.l.b16 %v430
    %v440 = vunpack.c.l.b16 %v431
    %v441 = vunpack.c.l.b16 %v432
    %v442 = vpack.c.b16 %v439, %v438
    %v443 = vpack.c.b16 %v441, %v440
    %v447 = vsel %vm53, %v427, 0
    %449 = vmatpush.bf16.msra.mxu0 0
    %450 = vmatpush.bf16.msra.mxu0 0
    %451 = vmatpush.bf16.msra.mxu0 0
    %452 = vmatpush.bf16.msra.mxu0 0
    %453 = vmatpush.bf16.msra.mxu0 0
    %454 = vmatpush.bf16.msra.mxu0 0
    %455 = vmatpush.bf16.msra.mxu0 %v443
    %456 = vmatpush.bf16.msra.mxu0 %v442
    %457 = vmatmul.bf16.gmra.mxu0 %v447
    %v458 = vpop.f32.mrf.mxu0
    %v459 = vadd.f32 %v433, %v458
    %v460 = vpop.f32.mrf.mxu0
    %v461 = vadd.f32 %v433, %v460
    %462 = vdwg.mxu0
    %vm463 = vcmp.ge.f32.partialorder %v459, 0.0
    %vm464 = vcmp.ge.f32.partialorder %v461, 0.0
    %v465 = vmul.f32 %v459, 0.2
    %v466 = vmul.f32 %v461, 0.2
    %v467 = vsel %vm463, %v459, %v465
    %v468 = vsel %vm464, %v461, %v466
    %v469 = vsel %vm53, %v467, 0.0
    %v470 = vsel %vm53, %v468, 0.0
    %v471 = vadd.f32 %v469, %v470
    %v472 = vrot.slane %v471, 4
    %v473 = vadd.f32 %v471, %v472
    %v474 = vrot.slane %v473, 2
    %v475 = vadd.f32 %v473, %v474
    %v476 = vrot.slane %v475, 1
    %v477 = vadd.f32 %v475, %v476
    %v478 = vmul.f32 %v477, %v92
    %v479 = vsub.f32 %v467, %v478
    %v480 = vsub.f32 %v468, %v478
    %v481 = vmul.f32 %v479, %v479
    %v482 = vmul.f32 %v480, %v480
    %v483 = vsel %vm53, %v481, 0.0
    %v484 = vsel %vm53, %v482, 0.0
    %v485 = vadd.f32 %v483, %v484
    %v486 = vrot.slane %v485, 4
    %v487 = vadd.f32 %v485, %v486
    %v488 = vrot.slane %v487, 2
    %v489 = vadd.f32 %v487, %v488
    %v490 = vrot.slane %v489, 1
    %v491 = vadd.f32 %v489, %v490
    %v492 = vmul.f32 %v491, %v92
    %v493 = vadd.f32 %v492, 1e-05
    %v494 = vrsqrt.pop %v493
    %v495 = vmul.f32 %v494, %v493
    %v496 = vmul.f32 %v495, %v494
    %v497 = vmul.f32 0.5, %v496
    %v498 = vsub.f32 1.5, %v497
    %v499 = vmul.f32 %v494, %v498
    %vm500 = vweird.f32 %v493
    %vm501 = vweird.f32 %v494
    %vm502 = vmor %vm500, %vm501
    %v503 = vsel %vm502, %v494, %v499
    %v504 = vmul.f32 %v32, %v503
    %v505 = vmul.f32 %v478, %v504
    %v507 = vrot.slane %v505, 7
    %v509 = vsub.f32 %v32, %v507
    %v510 = vperm.slane %v504, 5
    %v511 = vmul.f32 %v467, %v510
    %v512 = vmul.f32 %v468, %v510
    %v513 = vperm.slane %v509, 6
    %v514 = vadd.f32 %v511, %v513
    %v515 = vadd.f32 %v512, %v513
    %v516 = vpack.c.bf16 %v515, %v514
    %s517 = scalar_lea.vmem [#allocation2], 80
    %v518 = vld [vmem:[%s517] sm:$0xf]
    %v519 = vld [vmem:[%s517 + $0x4] sm:$0xf]
    %v520 = vld [vmem:[%s517 + $0x8] sm:$0xf]
    %v521 = vld [vmem:[%s517 + $0xc] sm:$0xf]
    %v522 = vperm.slane %v32, 7
    %v527 = vunpack.c.l.b16 %v518
    %v528 = vunpack.c.l.b16 %v519
    %v529 = vunpack.c.l.b16 %v520
    %v530 = vunpack.c.l.b16 %v521
    %v531 = vpack.c.b16 %v528, %v527
    %v532 = vpack.c.b16 %v530, %v529
    %v536 = vsel %vm53, %v516, 0
    %538 = vmatpush.bf16.msra.mxu0 0
    %539 = vmatpush.bf16.msra.mxu0 0
    %540 = vmatpush.bf16.msra.mxu0 0
    %541 = vmatpush.bf16.msra.mxu0 0
    %542 = vmatpush.bf16.msra.mxu0 0
    %543 = vmatpush.bf16.msra.mxu0 0
    %544 = vmatpush.bf16.msra.mxu0 %v532
    %545 = vmatpush.bf16.msra.mxu0 %v531
    %546 = vmatmul.bf16.gmra.mxu0 %v536
    %v547 = vpop.f32.mrf.mxu0
    %v548 = vadd.f32 %v522, %v547
    %v549 = vpop.f32.mrf.mxu0
    %v550 = vadd.f32 %v522, %v549
    %551 = vdwg.mxu0
    %v552 = vtanh.pop %v548
    %v553 = vtanh.pop %v550
    %556 = vrot.lane.b32.xlu0 %v307, 8
    %v557 = vpop.permute.xlu0 %556
    %558 = vrot.lane.b32.xlu0 %v308, 8
    %v559 = vpop.permute.xlu0 %558
    %564 = vrot.lane.b32.xlu0 %v552, 24
    %v565 = vpop.permute.xlu0 %564
    %566 = vrot.lane.b32.xlu0 %v553, 24
    %v567 = vpop.permute.xlu0 %566
    %v570 = vsel %vm335, %v333, %v557
    %v571 = vsel %vm335, %v334, %v559
    %vm572 = vcmask 195584
    %v573 = vsel %vm572, %v570, %v565
    %v574 = vsel %vm572, %v571, %v567
    %vm575 = vcmask 457728
    %576 = vst.msk [vmem:[%s2] sm:$0xff] %vm575, %v573
    %577 = vst.msk [vmem:[%s2 + $0x8] sm:$0xff] %vm575, %v574
    // Predicated region
    $region14: #{vae_forward.1} parent=1 // pred_check
      _
    $region15: #{vae_forward.1} parent=1 // pred_check_branch
      %579 = sbr.rel (0) target = $region17
    $region16: #{vae_forward.1} parent=1 // pred_region
      _
    $region17: #{vae_forward.1} parent=1 // pred_fallthru
      _
    // Predicated region
    $region18: #{vae_forward.1} parent=1 // pred_check
      _
    $region19: #{vae_forward.1} parent=1 // pred_check_branch
      %581 = sbr.rel (0) target = $region21
    $region20: #{vae_forward.1} parent=1 // pred_region
      _
    $region21: #{vae_forward.1} parent=1 // pred_fallthru
      _
    %582 = vsyncpa [#allocation3], 1

</llo_original>
